<compile_context>
chip_gen: v7x
topology: tpu7x:2x2x1
jax: 0.10.0
libtpu: 0.0.40
codegen_flags: <defaults>
</compile_context>

<pallas_src>
import functools

import jax
import jax.numpy as jnp
from jax.experimental import pallas as pl
from jax.experimental.pallas import tpu as pltpu

LN_EPS = 1e-12  # BERT-style transformer.LayerNorm epsilon used in Doc2EDAG

# Target per-step input tile size (bytes).  ~2 MiB reaches ~85%+ of HBM roofline
# on v5e/v6e/v7x and, with double-buffered in+out blocks, keeps total VMEM use
# around ~8 MiB -- comfortably under the default scoped VMEM limit on all gens.
_TARGET_TILE_BYTES = 2 << 20


def _sent_pos_enc_kernel(x_ref, pos_ref, gamma_ref, beta_ref, o_ref):
    # x_ref:     (TB, N, H)  batch-tile of element embeddings
    # pos_ref:   (N, H)      position embeddings (grid-invariant block)
    # gamma_ref: (1, H)      LayerNorm scale
    # beta_ref:  (1, H)      LayerNorm bias
    x = x_ref[...].astype(jnp.float32)                     # (TB, N, H)
    pos = pos_ref[...].astype(jnp.float32)                 # (N, H)

    y = x + pos[None, :, :]                                # broadcast over TB

    # Single-pass LayerNorm statistics over the hidden (lane) dimension:
    #   var = E[y^2] - E[y]^2   (f32 accumulation; clamp tiny negative values)
    mean = jnp.mean(y, axis=-1, keepdims=True)
    mean_sq = jnp.mean(y * y, axis=-1, keepdims=True)
    var = jnp.maximum(mean_sq - mean * mean, 0.0)
    inv_std = jax.lax.rsqrt(var + LN_EPS)
    norm = (y - mean) * inv_std

    gamma = gamma_ref[...].astype(jnp.float32)[None, :, :]  # (1, 1, H)
    beta = beta_ref[...].astype(jnp.float32)[None, :, :]    # (1, 1, H)
    out = norm * gamma + beta

    # TODO(synk): dropout (p=0.1) treated as eval-mode identity; training-mode
    # stochastic masking would use pltpu.prng_seed + pltpu.stateful_bernoulli.
    o_ref[...] = out.astype(o_ref.dtype)


def _pick_batch_tile(B, N, H, itemsize):
    """Largest TB (<= B) whose (TB, N, H) input tile stays near the byte target."""
    bytes_per_elem = N * H * itemsize
    tb = max(1, _TARGET_TILE_BYTES // max(bytes_per_elem, 1))
    return int(min(B, tb))


@functools.partial(jax.jit, static_argnames=())
def sentence_pos_encoder(batch_elem_emb, emb_table, gamma, beta, sent_pos_ids=None):
    """JAX/Pallas equivalent of SentencePosEncoder.forward (eval mode)."""
    B, N, H = batch_elem_emb.shape

    # Lane-density: keep the output last dim a multiple of the 128-lane width so
    # stores lower to unmasked vst (real Doc2EDAG uses H=768 = 6*128).
    assert H % 128 == 0, f"hidden_size={H} must be a multiple of 128 (lane width)"

    # Embedding lookup (glue).  Default ids = arange(N) -> static slice.  For an
    # explicit id vector, the XLA-side gather is fine: its output is only (N, H),
    # negligible next to the (B, N, H) HBM stream.
    if sent_pos_ids is None:
        pos_emb = emb_table[:N]                               # (N, H)
    else:
        pos_emb = jnp.take(emb_table, sent_pos_ids, axis=0)   # (N, H)

    gamma2d = gamma.reshape(1, H)
    beta2d = beta.reshape(1, H)

    tb = _pick_batch_tile(B, N, H, batch_elem_emb.dtype.itemsize)
    grid = (pl.cdiv(B, tb),)

    out = pl.pallas_call(
        _sent_pos_enc_kernel,
        out_shape=jax.ShapeDtypeStruct((B, N, H), batch_elem_emb.dtype),
        grid=grid,
        in_specs=[
            pl.BlockSpec((tb, N, H), lambda b: (b, 0, 0)),    # batch_elem_emb
            pl.BlockSpec((N, H), lambda b: (0, 0)),           # pos_emb (invariant)
            pl.BlockSpec((1, H), lambda b: (0, 0)),           # gamma   (invariant)
            pl.BlockSpec((1, H), lambda b: (0, 0)),           # beta    (invariant)
        ],
        out_specs=pl.BlockSpec((tb, N, H), lambda b: (b, 0, 0)),
        compiler_params=pltpu.CompilerParams(
            dimension_semantics=("parallel",)),
    )(batch_elem_emb, pos_emb, gamma2d, beta2d)
    return out


def _reference(batch_elem_emb, emb_table, gamma, beta):
    B, N, H = batch_elem_emb.shape
    pos = emb_table[:N]
    y = batch_elem_emb.astype(jnp.float32) + pos.astype(jnp.float32)[None]
    mean = jnp.mean(y, axis=-1, keepdims=True)
    var = jnp.mean((y - mean) ** 2, axis=-1, keepdims=True)
    norm = (y - mean) / jnp.sqrt(var + LN_EPS)
    return norm * gamma + beta


if __name__ == "__main__":
    key = jax.random.PRNGKey(0)
    k_x, k_emb = jax.random.split(key)

    # Small but lane-dense test shapes: batch=4 sentences-sets, N=8 sentences,
    # hidden=128 (one full lane width; production Doc2EDAG uses 768 = 6*128).
    B, N, H = 4, 8, 128
    MAX_SENT_NUM = 100

    batch_elem_emb = jax.random.normal(k_x, (B, N, H), dtype=jnp.float32)
    # nn.Embedding default init ~ N(0, 1); LayerNorm: gamma=1, beta=0.
    emb_table = jax.random.normal(k_emb, (MAX_SENT_NUM, H), dtype=jnp.float32)
    gamma = jnp.ones((H,), dtype=jnp.float32)
    beta = jnp.zeros((H,), dtype=jnp.float32)

    out = sentence_pos_encoder(batch_elem_emb, emb_table, gamma, beta)
    out = jax.block_until_ready(out)

    ref = _reference(batch_elem_emb, emb_table, gamma, beta)
    assert out.shape == (B, N, H)
    assert jnp.allclose(out.astype(jnp.float32), ref, atol=1e-4, rtol=1e-4), (
        "mismatch vs reference")

    print("KERNEL_OK")
</pallas_src>

<mosaic_0001>
module attributes {stable_mosaic.version = 11 : i64} {
  func.func @_sent_pos_enc_kernel(%arg0: i32, %arg1: memref<4x8x128xf32, #tpu.memory_space<vmem>>, %arg2: memref<8x128xf32, #tpu.memory_space<vmem>>, %arg3: memref<1x128xf32, #tpu.memory_space<vmem>>, %arg4: memref<1x128xf32, #tpu.memory_space<vmem>>, %arg5: memref<4x8x128xf32, #tpu.memory_space<vmem>>) attributes {dimension_semantics = [#tpu.dimension_semantics<parallel>], iteration_bounds = array<i64: 1>, scalar_prefetch = 0 : i64, scratch_operands = 0 : i64, tpu.core_type = #tpu.core_type<tc>, window_params = [{transform_indices = @transform_0, window_bounds = array<i64: 4, 8, 128>}, {pipeline_mode = #tpu.pipeline_mode<synchronous>, transform_indices = @transform_1, window_bounds = array<i64: 8, 128>}, {pipeline_mode = #tpu.pipeline_mode<synchronous>, transform_indices = @transform_2, window_bounds = array<i64: 1, 128>}, {pipeline_mode = #tpu.pipeline_mode<synchronous>, transform_indices = @transform_3, window_bounds = array<i64: 1, 128>}, {transform_indices = @transform_4, window_bounds = array<i64: 4, 8, 128>}]} {
    %c0 = arith.constant 0 : index
    %c0_0 = arith.constant 0 : index
    %c0_1 = arith.constant 0 : index
    %0 = vector.load %arg1[%c0, %c0_0, %c0_1] : memref<4x8x128xf32, #tpu.memory_space<vmem>>, vector<4x8x128xf32>
    %c0_2 = arith.constant 0 : index
    %c0_3 = arith.constant 0 : index
    %1 = vector.load %arg2[%c0_2, %c0_3] : memref<8x128xf32, #tpu.memory_space<vmem>>, vector<8x128xf32>
    %2 = vector.shape_cast %1 : vector<8x128xf32> to vector<1x8x128xf32>
    %3 = vector.broadcast %2 : vector<1x8x128xf32> to vector<4x8x128xf32>
    %4 = arith.addf %0, %3 : vector<4x8x128xf32>
    %cst = arith.constant dense<0.000000e+00> : vector<4x8xf32>
    %5 = vector.multi_reduction <add>, %4, %cst [2] : vector<4x8x128xf32> to vector<4x8xf32>
    %6 = vector.shape_cast %5 : vector<4x8xf32> to vector<4x8x1xf32>
    %cst_4 = arith.constant 1.280000e+02 : f32
    %7 = vector.broadcast %cst_4 : f32 to vector<4x8x1xf32>
    %8 = arith.divf %6, %7 : vector<4x8x1xf32>
    %9 = arith.mulf %4, %4 : vector<4x8x128xf32>
    %cst_5 = arith.constant dense<0.000000e+00> : vector<4x8xf32>
    %10 = vector.multi_reduction <add>, %9, %cst_5 [2] : vector<4x8x128xf32> to vector<4x8xf32>
    %11 = vector.shape_cast %10 : vector<4x8xf32> to vector<4x8x1xf32>
    %cst_6 = arith.constant 1.280000e+02 : f32
    %12 = vector.broadcast %cst_6 : f32 to vector<4x8x1xf32>
    %13 = arith.divf %11, %12 : vector<4x8x1xf32>
    %14 = arith.mulf %8, %8 : vector<4x8x1xf32>
    %15 = arith.subf %13, %14 : vector<4x8x1xf32>
    %cst_7 = arith.constant 0.000000e+00 : f32
    %16 = vector.broadcast %cst_7 : f32 to vector<4x8x1xf32>
    %17 = arith.maximumf %15, %16 : vector<4x8x1xf32>
    %cst_8 = arith.constant 9.99999996E-13 : f32
    %18 = vector.broadcast %cst_8 : f32 to vector<4x8x1xf32>
    %19 = arith.addf %17, %18 : vector<4x8x1xf32>
    %20 = math.rsqrt %19 : vector<4x8x1xf32>
    %21 = vector.broadcast %8 : vector<4x8x1xf32> to vector<4x8x128xf32>
    %22 = arith.subf %4, %21 : vector<4x8x128xf32>
    %23 = vector.broadcast %20 : vector<4x8x1xf32> to vector<4x8x128xf32>
    %24 = arith.mulf %22, %23 : vector<4x8x128xf32>
    %c0_9 = arith.constant 0 : index
    %c0_10 = arith.constant 0 : index
    %25 = vector.load %arg3[%c0_9, %c0_10] : memref<1x128xf32, #tpu.memory_space<vmem>>, vector<1x128xf32>
    %26 = vector.shape_cast %25 : vector<1x128xf32> to vector<1x1x128xf32>
    %c0_11 = arith.constant 0 : index
    %c0_12 = arith.constant 0 : index
    %27 = vector.load %arg4[%c0_11, %c0_12] : memref<1x128xf32, #tpu.memory_space<vmem>>, vector<1x128xf32>
    %28 = vector.shape_cast %27 : vector<1x128xf32> to vector<1x1x128xf32>
    %29 = vector.broadcast %26 : vector<1x1x128xf32> to vector<4x8x128xf32>
    %30 = arith.mulf %24, %29 : vector<4x8x128xf32>
    %31 = vector.broadcast %28 : vector<1x1x128xf32> to vector<4x8x128xf32>
    %32 = arith.addf %30, %31 : vector<4x8x128xf32>
    %c0_13 = arith.constant 0 : index
    %c0_14 = arith.constant 0 : index
    %c0_15 = arith.constant 0 : index
    %33 = vector.load %arg5[%c0_13, %c0_14, %c0_15] : memref<4x8x128xf32, #tpu.memory_space<vmem>>, vector<4x8x128xf32>
    tpu.vector_store %arg5[%c0_13, %c0_14, %c0_15], %32 {strides = array<i32>} : memref<4x8x128xf32, #tpu.memory_space<vmem>>, vector<4x8x128xf32>,
    return
  }
  func.func @transform_0(%arg0: i32) -> (i32, i32, i32) {
    %c0_i32 = arith.constant 0 : i32
    %c0_i32_0 = arith.constant 0 : i32
    %c0_i32_1 = arith.constant 0 : i32
    return %arg0, %c0_i32, %c0_i32_0 : i32, i32, i32
  }
  func.func @transform_1(%arg0: i32) -> (i32, i32) {
    %c0_i32 = arith.constant 0 : i32
    %c0_i32_0 = arith.constant 0 : i32
    %c0_i32_1 = arith.constant 0 : i32
    return %c0_i32, %c0_i32_0 : i32, i32
  }
  func.func @transform_2(%arg0: i32) -> (i32, i32) {
    %c0_i32 = arith.constant 0 : i32
    %c0_i32_0 = arith.constant 0 : i32
    %c0_i32_1 = arith.constant 0 : i32
    return %c0_i32, %c0_i32_0 : i32, i32
  }
  func.func @transform_3(%arg0: i32) -> (i32, i32) {
    %c0_i32 = arith.constant 0 : i32
    %c0_i32_0 = arith.constant 0 : i32
    %c0_i32_1 = arith.constant 0 : i32
    return %c0_i32, %c0_i32_0 : i32, i32
  }
  func.func @transform_4(%arg0: i32) -> (i32, i32, i32) {
    %c0_i32 = arith.constant 0 : i32
    %c0_i32_0 = arith.constant 0 : i32
    %c0_i32_1 = arith.constant 0 : i32
    return %arg0, %c0_i32, %c0_i32_0 : i32, i32, i32
  }
}

</mosaic_0001>

<llo_original>
// kernel: sentence_pos_encoder.1
$region0: #{sentence_pos_encoder.1}
  #allocation0 [shape = 'u32[]', space=smem, size = 0x4, offset = 0x4, fixed_abs, tag = 'smem constant byte address 0x4 - core index']
  #allocation1 [shape = 'u32[144,128]{1,0:T(1,128)}', space=vmem, size = 0x12000, scoped, tag = 'internal scratch']
  %s0 = inlined_call_operand.hbm [shape: f32[4,8,128], index: 0, kind: input, shape index: {}]
  %s1 = inlined_call_operand.vmem [shape: f32[8,128], index: 1, kind: input, shape index: {}]
  %s2 = inlined_call_operand.vmem [shape: f32[1,128], index: 2, kind: input, shape index: {}]
  %s3 = inlined_call_operand.vmem [shape: f32[1,128], index: 3, kind: input, shape index: {}]
  %s4 = inlined_call_operand.hbm [shape: f32[4,8,128], index: 4, kind: output, shape index: {}]
  %s5 = sld [smem:[#allocation0]]
  $region30: #{sentence_pos_encoder.1} parent=0
    _
  %s7 = ssub.s32 1, %s5
  %s8 = scalar_select 0, %s7, %s5
  $region1: #{sentence_pos_encoder.1} parent=0
    #allocation2 [shape = 'u8[16384]{0}', space=vmem, size = 0x4000, scoped, tag = 'input window, operand 0, single buffered']
    #allocation3 [shape = 's32[1]{0}', space=sflag, size = 0x4, scoped, tag = 'scoped memory for sentence_pos_encoder.1']
    #allocation4 [shape = 's32[1]{0}', space=sflag, size = 0x4, scoped, tag = 'scoped memory for sentence_pos_encoder.1']
    #allocation5 [shape = 'u8[16384]{0}', space=vmem, size = 0x4000, scoped, tag = 'output window, operand 0, single buffered']
    %9 = vsyncpa [#allocation3], 0
    %10 = vsyncpa [#allocation4], 0
    // Predicated region
    $region2: #{sentence_pos_encoder.1} parent=1 // pred_check
      _
    $region3: #{sentence_pos_encoder.1} parent=1 // pred_check_branch
      %12 = sbr.rel (0) target = $region5
    $region4: #{sentence_pos_encoder.1} parent=1 // pred_region
      %s14 = ssub.s32 512, 512
      %15 = vsyncadd [#allocation3], %s14
      %s16 = sshll.u32 [#allocation2], 4
      %s17 = int_to_ptr.vmem [resolvable:$true] %s16
      %22 = dma.hbm_to_vmem [thread:$0]  %s0, 512, %s17, [#allocation3], 128, 128, 8
    $region5: #{sentence_pos_encoder.1} parent=1 // pred_fallthru
      _
    // Predicated region
    $region6: #{sentence_pos_encoder.1} parent=1 // pred_check
      _
    $region7: #{sentence_pos_encoder.1} parent=1 // pred_check_branch
      %24 = sbr.rel (0) target = $region9
    $region8: #{sentence_pos_encoder.1} parent=1 // pred_region
      _
    $region9: #{sentence_pos_encoder.1} parent=1 // pred_fallthru
      _
    // Predicated region
    $region10: #{sentence_pos_encoder.1} parent=1 // pred_check
      _
    $region11: #{sentence_pos_encoder.1} parent=1 // pred_check_branch
      %26 = sbr.rel (0) target = $region13
    $region12: #{sentence_pos_encoder.1} parent=1 // pred_region
      _
    $region13: #{sentence_pos_encoder.1} parent=1 // pred_fallthru
      _
    // Predicated region
    $region14: #{sentence_pos_encoder.1} parent=1 // pred_check
      _
    $region15: #{sentence_pos_encoder.1} parent=1 // pred_check_branch
      %28 = sbr.rel (0) target = $region17
    $region16: #{sentence_pos_encoder.1} parent=1 // pred_region
      _
    $region17: #{sentence_pos_encoder.1} parent=1 // pred_fallthru
      _
    // Predicated region
    $region18: #{sentence_pos_encoder.1} parent=1 // pred_check
      _
    $region19: #{sentence_pos_encoder.1} parent=1 // pred_check_branch
      %30 = sbr.rel (0) target = $region21
    $region20: #{sentence_pos_encoder.1} parent=1 // pred_region
      %31 = dma.done [#allocation3], 512
    $region21: #{sentence_pos_encoder.1} parent=1 // pred_fallthru
      _
    %v32 = vld [vmem:[#allocation2] sm:$0xff]
    %v33 = vld [vmem:[#allocation2 + $0x8] sm:$0xff]
    %v34 = vld [vmem:[#allocation2 + $0x10] sm:$0xff]
    %v35 = vld [vmem:[#allocation2 + $0x18] sm:$0xff]
    %v36 = vld [vmem:[%s1] sm:$0xff]
    %v37 = vadd.f32 %v32, %v36
    %v38 = vadd.f32 %v33, %v36
    %v39 = vadd.f32 %v34, %v36
    %v40 = vadd.f32 %v35, %v36
    %41 = vadd.xlane.f32.xlu0 %v37
    %v42 = vpop.xlane.xlu0 %41
    %43 = vadd.xlane.f32.xlu0 %v38
    %v44 = vpop.xlane.xlu0 %43
    %45 = vadd.xlane.f32.xlu0 %v39
    %v46 = vpop.xlane.xlu0 %45
    %47 = vadd.xlane.f32.xlu0 %v40
    %v48 = vpop.xlane.xlu0 %47
    %v49 = vrcp.pop 128.0
    %v50 = vmul.f32 %v42, %v49
    %v51 = vmul.f32 %v44, %v49
    %v52 = vmul.f32 %v46, %v49
    %v53 = vmul.f32 %v48, %v49
    %v54 = vmul.f32 %v37, %v37
    %v55 = vmul.f32 %v38, %v38
    %v56 = vmul.f32 %v39, %v39
    %v57 = vmul.f32 %v40, %v40
    %58 = vadd.xlane.f32.xlu0 %v54
    %v59 = vpop.xlane.xlu0 %58
    %60 = vadd.xlane.f32.xlu0 %v55
    %v61 = vpop.xlane.xlu0 %60
    %62 = vadd.xlane.f32.xlu0 %v56
    %v63 = vpop.xlane.xlu0 %62
    %64 = vadd.xlane.f32.xlu0 %v57
    %v65 = vpop.xlane.xlu0 %64
    %v66 = vmul.f32 %v59, %v49
    %v67 = vmul.f32 %v61, %v49
    %v68 = vmul.f32 %v63, %v49
    %v69 = vmul.f32 %v65, %v49
    %v70 = vmul.f32 %v50, %v50
    %v71 = vmul.f32 %v51, %v51
    %v72 = vmul.f32 %v52, %v52
    %v73 = vmul.f32 %v53, %v53
    %v74 = vsub.f32 %v66, %v70
    %v75 = vsub.f32 %v67, %v71
    %v76 = vsub.f32 %v68, %v72
    %v77 = vsub.f32 %v69, %v73
    %v78 = vmax.f32 %v74, 0.0
    %v79 = vmax.f32 %v75, 0.0
    %v80 = vmax.f32 %v76, 0.0
    %v81 = vmax.f32 %v77, 0.0
    %v82 = vadd.f32 %v78, 1e-12
    %v83 = vadd.f32 %v79, 1e-12
    %v84 = vadd.f32 %v80, 1e-12
    %v85 = vadd.f32 %v81, 1e-12
    %v86 = vrsqrt.pop %v82
    %v87 = vrsqrt.pop %v83
    %v88 = vrsqrt.pop %v84
    %v89 = vrsqrt.pop %v85
    %v90 = vsub.f32 %v37, %v50
    %v91 = vsub.f32 %v38, %v51
    %v92 = vsub.f32 %v39, %v52
    %v93 = vsub.f32 %v40, %v53
    %v94 = vmul.f32 %v90, %v86
    %v95 = vmul.f32 %v91, %v87
    %v96 = vmul.f32 %v92, %v88
    %v97 = vmul.f32 %v93, %v89
    %v98 = vld [vmem:[%s2] sm:$0x1]
    %v99 = vld [vmem:[%s3] sm:$0x1]
    %v101 = vlaneseq
    %v102 = vshrl.u32 %v101, 7
    %v103 = vsub.s32 0, %v102
    %v104 = vrot.slane %v98, %v103
    %v106 = vmul.f32 %v94, %v104
    %v107 = vmul.f32 %v95, %v104
    %v108 = vmul.f32 %v96, %v104
    %v109 = vmul.f32 %v97, %v104
    %v111 = vlaneseq
    %v112 = vshrl.u32 %v111, 7
    %v113 = vsub.s32 0, %v112
    %v114 = vrot.slane %v99, %v113
    %v116 = vadd.f32 %v106, %v114
    %v117 = vadd.f32 %v107, %v114
    %v118 = vadd.f32 %v108, %v114
    %v119 = vadd.f32 %v109, %v114
    %120 = vst [vmem:[#allocation5] sm:$0xff] %v116
    %121 = vst [vmem:[#allocation5 + $0x8] sm:$0xff] %v117
    %122 = vst [vmem:[#allocation5 + $0x10] sm:$0xff] %v118
    %123 = vst [vmem:[#allocation5 + $0x18] sm:$0xff] %v119
    // Predicated region
    $region22: #{sentence_pos_encoder.1} parent=1 // pred_check
      _
    $region23: #{sentence_pos_encoder.1} parent=1 // pred_check_branch
      %125 = sbr.rel (0) target = $region25
    $region24: #{sentence_pos_encoder.1} parent=1 // pred_region
      %s127 = ssub.s32 512, 512
      %128 = vsyncadd [#allocation4], %s127
      %s129 = sshll.u32 [#allocation5], 4
      %s130 = int_to_ptr.vmem [resolvable:$true] %s129
      %135 = dma.vmem_to_hbm [thread:$0]  %s130, 512, %s4, [#allocation4], 128, 128, 8
    $region25: #{sentence_pos_encoder.1} parent=1 // pred_fallthru
      _
    // Predicated region
    $region26: #{sentence_pos_encoder.1} parent=1 // pred_check
      _
    $region27: #{sentence_pos_encoder.1} parent=1 // pred_check_branch
      %137 = sbr.rel (0) target = $region29
    $region28: #{sentence_pos_encoder.1} parent=1 // pred_region
      %138 = dma.done [#allocation4], 512
    $region29: #{sentence_pos_encoder.1} parent=1 // pred_fallthru
      _
    %139 = vsyncpa [#allocation3], 1
    %140 = vsyncpa [#allocation4], 1

</llo_original>
